<compile_context>
chip_gen: v7x
topology: tpu7x:2x2x1
jax: 0.10.0
libtpu: 0.0.40
codegen_flags: <defaults>
</compile_context>

<pallas_src>
import math

import jax
import jax.numpy as jnp
from jax.experimental import pallas as pl
from jax.experimental.pallas import tpu as pltpu


def _round_up(a, b):
    return -(-a // b) * b


def _sublane(dtype):
    # Min sublane tile: 8 for 32-bit, 16 for 16-bit, 32 for 8-bit dtypes.
    return max(8, (8 * 4) // jnp.dtype(dtype).itemsize)


def _vmem_budget_bytes():
    # Generation-aware cap: ~75% of physical VMEM (per TensorCore).
    try:
        cap = int(pltpu.get_tpu_info().vmem_capacity_bytes)
    except Exception:
        cap = 64 << 20  # conservative fallback (v7x per-TC size)
    return (cap * 3) // 4


# --------------------------- kernels ---------------------------------------

def _tfe_fma_kernel(x_ref, w_ref, b_ref, o_ref):
    # x: (tm, 1), w/b: (1, tn), o: (tm, tn).  f32 accumulate, cast at the store.
    y = (x_ref[...].astype(jnp.float32) * w_ref[...].astype(jnp.float32)
         + b_ref[...].astype(jnp.float32))
    o_ref[...] = jnp.maximum(y, 0.0).astype(o_ref.dtype)


def _tfe_grouped_kernel(x_ref, wsel_ref, b_ref, o_ref):
    # x: (tmg, r), wsel: (r, r*D) block-diagonal selection of w, b: (1, r*D).
    # (x @ wsel)[g, j*D + d] = x[g, j] * w[d]; MXU accumulates in f32.
    lhs = x_ref[...]
    rhs = wsel_ref[...]
    if lhs.dtype != rhs.dtype:
        ct = jnp.promote_types(lhs.dtype, rhs.dtype)
        lhs = lhs.astype(ct)
        rhs = rhs.astype(ct)
    y = jnp.dot(lhs, rhs, preferred_element_type=jnp.float32)
    y = y + b_ref[...].astype(jnp.float32)
    o_ref[...] = jnp.maximum(y, 0.0).astype(o_ref.dtype)


# --------------------------- wrappers ---------------------------------------

def _run_fma_path(x2d, w_row, b_row, out_dtype, tm_cap):
    """Broadcast-FMA path: lane-dense when D % 128 == 0, masked-store fallback
    otherwise (used for ragged M in the small-D case)."""
    M = x2d.shape[0]
    D = w_row.shape[1]
    budget = _vmem_budget_bytes()
    headroom = 2 << 20
    sub = max(_sublane(out_dtype), _sublane(x2d.dtype))
    isz_o = jnp.dtype(out_dtype).itemsize
    isz_x = jnp.dtype(x2d.dtype).itemsize
    isz_w = jnp.dtype(w_row.dtype).itemsize
    isz_b = jnp.dtype(b_row.dtype).itemsize

    def tm_for(tn):
        lanes = _round_up(tn, 128)                       # physical lane padding
        fixed = (2 * _sublane(w_row.dtype) * lanes * isz_w
                 + 2 * _sublane(b_row.dtype) * lanes * isz_b)   # w/b, 2 bufs each
        per_row = 2 * (lanes * isz_o + 128 * isz_x)      # out + (tm,1) x, 2 bufs
        t = (budget - headroom - fixed) // per_row
        t = min(t, tm_cap, _round_up(M, sub))
        return max(0, (t // sub) * sub)

    # Prefer tn == D (one contiguous writeback per row block); only split D
    # (multiples of 128) if even the minimum row tile would not fit in VMEM.
    tn = D
    tm = tm_for(tn)
    if tm < sub and D > 128:
        tn = _round_up(D // 2, 128)
        while tm_for(tn) < sub and tn > 128:
            tn = _round_up(tn // 2, 128)
        tm = tm_for(tn)
    tm = max(tm, sub)

    grid_m = pl.cdiv(M, tm)
    grid_d = pl.cdiv(D, tn)

    return pl.pallas_call(
        _tfe_fma_kernel,
        out_shape=jax.ShapeDtypeStruct((M, D), out_dtype),
        grid_spec=pltpu.PrefetchScalarGridSpec(
            num_scalar_prefetch=0,
            grid=(grid_m, grid_d),          # rows leading -> megacore shards rows
            in_specs=[
                pl.BlockSpec((tm, 1), lambda m, d: (m, 0)),
                pl.BlockSpec((1, tn), lambda m, d: (0, d)),
                pl.BlockSpec((1, tn), lambda m, d: (0, d)),
            ],
            out_specs=pl.BlockSpec((tm, tn), lambda m, d: (m, d)),
        ),
        compiler_params=pltpu.CompilerParams(
            dimension_semantics=("parallel", "parallel"),
            vmem_limit_bytes=int(budget),
        ),
    )(x2d, w_row, b_row)


def _run_grouped_path(x2d, weight, bias, r, out_dtype, tm_cap):
    """Lane-dense path for D % 128 != 0: output viewed as (M/r, r*D)."""
    M = x2d.shape[0]
    D = weight.shape[0]
    Mg, Dg = M // r, r * D                       # Dg is a multiple of 128

    x2g = x2d.reshape(Mg, r)                     # free reshape of the flat input

    # wsel[j, k*D + d] = w[d] if k == j else 0.  Tiny (r, r*D), built once.
    w_flat = weight.reshape(D)
    wsel = (jnp.eye(r, dtype=w_flat.dtype)[:, :, None]
            * w_flat[None, None, :]).reshape(r, Dg)
    b_tiled = jnp.tile(bias.reshape(1, D), (1, r))

    budget = _vmem_budget_bytes()
    headroom = 2 << 20
    sub = max(_sublane(out_dtype), _sublane(x2g.dtype))
    isz_o = jnp.dtype(out_dtype).itemsize
    isz_x = jnp.dtype(x2g.dtype).itemsize
    isz_w = jnp.dtype(wsel.dtype).itemsize
    isz_b = jnp.dtype(b_tiled.dtype).itemsize

    fixed = (2 * _round_up(r, _sublane(wsel.dtype)) * Dg * isz_w
             + 2 * _sublane(b_tiled.dtype) * Dg * isz_b)
    per_row = 2 * (Dg * isz_o + _round_up(r, 128) * isz_x)
    tmg = (budget - headroom - fixed) // per_row
    tmg = min(tmg, tm_cap, _round_up(Mg, sub))
    tmg = max(sub, (tmg // sub) * sub)

    out_g = pl.pallas_call(
        _tfe_grouped_kernel,
        out_shape=jax.ShapeDtypeStruct((Mg, Dg), out_dtype),
        grid_spec=pltpu.PrefetchScalarGridSpec(
            num_scalar_prefetch=0,
            grid=(pl.cdiv(Mg, tmg),),
            in_specs=[
                pl.BlockSpec((tmg, r), lambda m: (m, 0)),
                pl.BlockSpec((r, Dg), lambda m: (0, 0)),   # resident
                pl.BlockSpec((1, Dg), lambda m: (0, 0)),   # resident
            ],
            out_specs=pl.BlockSpec((tmg, Dg), lambda m: (m, 0)),
        ),
        compiler_params=pltpu.CompilerParams(
            dimension_semantics=("parallel",),
            vmem_limit_bytes=int(budget),
        ),
    )(x2g, wsel, b_tiled)

    return out_g.reshape(M, D)           # free: row-major layout is identical


def temporal_frequency_encoder(temporal_frequencies, weight, bias, *, tm_cap=4096):
    """Pallas implementation of TemporalFrequencyEncoder.forward.

    temporal_frequencies: (..., 1)
    weight: (expand_dim, 1)   (PyTorch Linear weight layout)
    bias:   (expand_dim,)
    returns: (..., expand_dim)
    """
    in_shape = temporal_frequencies.shape
    assert in_shape[-1] == 1, "last dim must be 1 (Linear in_features=1)"
    D = weight.shape[0]
    out_dtype = jnp.result_type(temporal_frequencies.dtype, weight.dtype)

    x2d = temporal_frequencies.reshape(-1, 1)    # (M, 1), free reshape
    M = x2d.shape[0]

    r = 128 // math.gcd(D, 128) if D % 128 != 0 else 1

    if r > 1 and M > 0 and M % r == 0:
        out2d = _run_grouped_path(x2d, weight, bias, r, out_dtype, tm_cap)
    else:
        # TODO(synk): when M is not a multiple of r the small-D case stays on the
        # masked-store path instead of splitting off a lane-dense bulk + tiny tail.
        out2d = _run_fma_path(x2d, weight.reshape(1, D), bias.reshape(1, D),
                              out_dtype, tm_cap)

    return out2d.reshape(in_shape[:-1] + (D,))


def _reference(temporal_frequencies, weight, bias):
    y = temporal_frequencies @ weight.T + bias
    return jnp.maximum(y, 0.0)


if __name__ == "__main__":
    key = jax.random.PRNGKey(0)
    ks = jax.random.split(key, 9)

    # --- Test 1: expand_dim=32 (grouped lane-dense path, r=4), batch=2, seq=8 ---
    D1, b1, s1 = 32, 2, 8
    w1 = jax.random.uniform(ks[0], (D1, 1), jnp.float32, -1.0, 1.0)
    bi1 = jax.random.uniform(ks[1], (D1,), jnp.float32, -1.0, 1.0)
    x1 = jax.random.normal(ks[2], (b1, s1, 1), jnp.float32)
    o1 = jax.block_until_ready(temporal_frequency_encoder(x1, w1, bi1))
    r1 = _reference(x1, w1, bi1)
    assert o1.shape == (b1, s1, D1), o1.shape
    assert jnp.allclose(o1, r1, atol=1e-5, rtol=1e-5), "mismatch (grouped, D=32)"

    # --- Test 2: expand_dim=48, M=21 not a multiple of r=8 -> FMA fallback path ---
    D2, b2, s2 = 48, 3, 7
    w2 = jax.random.uniform(ks[3], (D2, 1), jnp.float32, -1.0, 1.0)
    bi2 = jax.random.uniform(ks[4], (D2,), jnp.float32, -1.0, 1.0)
    x2 = jax.random.normal(ks[5], (b2, s2, 1), jnp.float32)
    o2 = jax.block_until_ready(temporal_frequency_encoder(x2, w2, bi2))
    r2 = _reference(x2, w2, bi2)
    assert o2.shape == (b2, s2, D2), o2.shape
    assert jnp.allclose(o2, r2, atol=1e-5, rtol=1e-5), "mismatch (fallback, D=48)"

    # --- Test 3: expand_dim=128 (lane-dense FMA path), batch=2, seq=8 ---
    D3, b3, s3 = 128, 2, 8
    w3 = jax.random.uniform(ks[6], (D3, 1), jnp.float32, -1.0, 1.0)
    bi3 = jax.random.uniform(ks[7], (D3,), jnp.float32, -1.0, 1.0)
    x3 = jax.random.normal(ks[8], (b3, s3, 1), jnp.float32)
    o3 = jax.block_until_ready(temporal_frequency_encoder(x3, w3, bi3))
    r3 = _reference(x3, w3, bi3)
    assert o3.shape == (b3, s3, D3), o3.shape
    assert jnp.allclose(o3, r3, atol=1e-5, rtol=1e-5), "mismatch (FMA, D=128)"

    print("KERNEL_OK")
</pallas_src>

<mosaic_0001>
module attributes {stable_mosaic.version = 11 : i64} {
  func.func @_tfe_grouped_kernel(%arg0: i32, %arg1: memref<8x4xf32, #tpu.memory_space<vmem>>, %arg2: memref<4x128xf32, #tpu.memory_space<vmem>>, %arg3: memref<1x128xf32, #tpu.memory_space<vmem>>, %arg4: memref<8x128xf32, #tpu.memory_space<vmem>>) attributes {dimension_semantics = [#tpu.dimension_semantics<parallel>], iteration_bounds = array<i64: 1>, scalar_prefetch = 0 : i64, scratch_operands = 0 : i64, tpu.core_type = #tpu.core_type<tc>, window_params = [{transform_indices = @transform_0, window_bounds = array<i64: 8, 4>}, {pipeline_mode = #tpu.pipeline_mode<synchronous>, transform_indices = @transform_1, window_bounds = array<i64: 4, 128>}, {pipeline_mode = #tpu.pipeline_mode<synchronous>, transform_indices = @transform_2, window_bounds = array<i64: 1, 128>}, {transform_indices = @transform_3, window_bounds = array<i64: 8, 128>}]} {
    %c0 = arith.constant 0 : index
    %c0_0 = arith.constant 0 : index
    %0 = vector.load %arg1[%c0, %c0_0] : memref<8x4xf32, #tpu.memory_space<vmem>>, vector<8x4xf32>
    %c0_1 = arith.constant 0 : index
    %c0_2 = arith.constant 0 : index
    %1 = vector.load %arg2[%c0_1, %c0_2] : memref<4x128xf32, #tpu.memory_space<vmem>>, vector<4x128xf32>
    %cst = arith.constant dense<0.000000e+00> : vector<8x128xf32>
    %2 = tpu.matmul %0, %1, %cst {dimension_numbers = #tpu.dot_dimension_numbers<[1], [0], [0], [1], [0, 0, 1, 1], [], []>} : vector<8x4xf32>, vector<4x128xf32>, vector<8x128xf32> -> vector<8x128xf32>
    %c0_3 = arith.constant 0 : index
    %c0_4 = arith.constant 0 : index
    %3 = vector.load %arg3[%c0_3, %c0_4] : memref<1x128xf32, #tpu.memory_space<vmem>>, vector<1x128xf32>
    %4 = vector.broadcast %3 : vector<1x128xf32> to vector<8x128xf32>
    %5 = arith.addf %2, %4 : vector<8x128xf32>
    %cst_5 = arith.constant 0.000000e+00 : f32
    %6 = vector.broadcast %cst_5 : f32 to vector<8x128xf32>
    %7 = arith.maximumf %5, %6 : vector<8x128xf32>
    %c0_6 = arith.constant 0 : index
    %c0_7 = arith.constant 0 : index
    %8 = vector.load %arg4[%c0_6, %c0_7] : memref<8x128xf32, #tpu.memory_space<vmem>>, vector<8x128xf32>
    tpu.vector_store %arg4[%c0_6, %c0_7], %7 {strides = array<i32>} : memref<8x128xf32, #tpu.memory_space<vmem>>, vector<8x128xf32>,
    return
  }
  func.func @transform_0(%arg0: i32) -> (i32, i32) {
    %c0_i32 = arith.constant 0 : i32
    %c0_i32_0 = arith.constant 0 : i32
    return %arg0, %c0_i32 : i32, i32
  }
  func.func @transform_1(%arg0: i32) -> (i32, i32) {
    %c0_i32 = arith.constant 0 : i32
    %c0_i32_0 = arith.constant 0 : i32
    %c0_i32_1 = arith.constant 0 : i32
    return %c0_i32, %c0_i32_0 : i32, i32
  }
  func.func @transform_2(%arg0: i32) -> (i32, i32) {
    %c0_i32 = arith.constant 0 : i32
    %c0_i32_0 = arith.constant 0 : i32
    %c0_i32_1 = arith.constant 0 : i32
    return %c0_i32, %c0_i32_0 : i32, i32
  }
  func.func @transform_3(%arg0: i32) -> (i32, i32) {
    %c0_i32 = arith.constant 0 : i32
    %c0_i32_0 = arith.constant 0 : i32
    return %arg0, %c0_i32 : i32, i32
  }
}

</mosaic_0001>

<llo_original>
// kernel: tpu_custom_call.1
$region0: #{tpu_custom_call.1}
  #allocation0 [shape = 'u32[]', space=smem, size = 0x4, offset = 0x4, fixed_abs, tag = 'smem constant byte address 0x4 - core index']
  #allocation1 [shape = 'u32[144,128]{1,0:T(1,128)}', space=vmem, size = 0x12000, scoped, tag = 'internal scratch']
  %s0 = inlined_call_operand.hbm [shape: f32[4,4], index: 0, kind: input, shape index: {}]
  %s1 = inlined_call_operand.hbm [shape: f32[4,128], index: 1, kind: input, shape index: {}]
  %s2 = inlined_call_operand.vmem [shape: f32[1,128], index: 2, kind: input, shape index: {}]
  %s3 = inlined_call_operand.hbm [shape: f32[4,128], index: 3, kind: output, shape index: {}]
  %s4 = sld [smem:[#allocation0]]
  $region30: #{tpu_custom_call.1} parent=0
    _
  %s6 = ssub.s32 1, %s4
  %s7 = scalar_select 0, %s6, %s4
  $region1: #{tpu_custom_call.1} parent=0
    #allocation2 [shape = 'u8[4096]{0}', space=vmem, size = 0x1000, scoped, tag = 'input window, operand 0, single buffered']
    #allocation3 [shape = 's32[1]{0}', space=sflag, size = 0x4, scoped, tag = 'scoped memory for tpu_custom_call.1']
    #allocation4 [shape = 's32[1]{0}', space=sflag, size = 0x4, scoped, tag = 'scoped memory for tpu_custom_call.1']
    #allocation5 [shape = 'u8[2048]{0}', space=vmem, size = 0x800, scoped, tag = 'input window, operand 1, single buffered']
    #allocation6 [shape = 's32[1]{0}', space=sflag, size = 0x4, scoped, tag = 'scoped memory for tpu_custom_call.1']
    #allocation7 [shape = 'u8[4096]{0}', space=vmem, size = 0x1000, scoped, tag = 'output window, operand 0, single buffered']
    %8 = vsyncpa [#allocation3], 0
    %9 = vsyncpa [#allocation6], 0
    %10 = vsyncpa [#allocation4], 0
    // Predicated region
    $region2: #{tpu_custom_call.1} parent=1 // pred_check
      _
    $region3: #{tpu_custom_call.1} parent=1 // pred_check_branch
      %12 = sbr.rel (0) target = $region5
    $region4: #{tpu_custom_call.1} parent=1 // pred_region
      %s14 = ssub.s32 128, 64
      %15 = vsyncadd [#allocation3], %s14
      %s16 = sshll.u32 [#allocation2], 4
      %s17 = int_to_ptr.vmem [resolvable:$true] %s16
      %22 = dma.hbm_to_vmem [thread:$0]  %s0, 64, %s17, [#allocation3], 64, 64, 4
    $region5: #{tpu_custom_call.1} parent=1 // pred_fallthru
      _
    // Predicated region
    $region6: #{tpu_custom_call.1} parent=1 // pred_check
      _
    $region7: #{tpu_custom_call.1} parent=1 // pred_check_branch
      %24 = sbr.rel (0) target = $region9
    $region8: #{tpu_custom_call.1} parent=1 // pred_region
      %s26 = ssub.s32 64, 64
      %27 = vsyncadd [#allocation6], %s26
      %s29 = sshll.u32 [#allocation5], 4
      %s30 = int_to_ptr.vmem [resolvable:$true] %s29
      %32 = dma.hbm_to_vmem [thread:$0]  %s1, 64, %s30, [#allocation6]
    $region9: #{tpu_custom_call.1} parent=1 // pred_fallthru
      _
    // Predicated region
    $region10: #{tpu_custom_call.1} parent=1 // pred_check
      _
    $region11: #{tpu_custom_call.1} parent=1 // pred_check_branch
      %34 = sbr.rel (0) target = $region13
    $region12: #{tpu_custom_call.1} parent=1 // pred_region
      _
    $region13: #{tpu_custom_call.1} parent=1 // pred_fallthru
      _
    // Predicated region
    $region14: #{tpu_custom_call.1} parent=1 // pred_check
      _
    $region15: #{tpu_custom_call.1} parent=1 // pred_check_branch
      %36 = sbr.rel (0) target = $region17
    $region16: #{tpu_custom_call.1} parent=1 // pred_region
      %37 = dma.done [#allocation3], 128
    $region17: #{tpu_custom_call.1} parent=1 // pred_fallthru
      _
    // Predicated region
    $region18: #{tpu_custom_call.1} parent=1 // pred_check
      _
    $region19: #{tpu_custom_call.1} parent=1 // pred_check_branch
      %39 = sbr.rel (0) target = $region21
    $region20: #{tpu_custom_call.1} parent=1 // pred_region
      %40 = dma.done [#allocation6], 64
    $region21: #{tpu_custom_call.1} parent=1 // pred_fallthru
      _
    %v41 = vld [vmem:[#allocation2] sm:$0xff]
    %v42 = vld [vmem:[#allocation5] sm:$0xf]
    %v43 = vld [vmem:[%s2] sm:$0x1]
    %v45 = vlaneseq
    %v46 = vshrl.u32 %v45, 7
    %v47 = vsub.s32 0, %v46
    %v48 = vrot.slane %v43, %v47
    %vm50 = vcmask 31744
    %v52 = vsel %vm50, %v41, 0
    %vm54 = vcmask 1043456
    %v56 = vsel %vm54, %v42, 0
    %58 = vmatprep.subr.mxu0 0.0
    %59 = vmatpush1.msra.mxu0 %v56
    %60 = vmatprep.subr.mxu0 0.0
    %61 = vmatpush1.msra.mxu0 0.0
    %62 = vmatprep.subr.mxu0 0.0
    %63 = vmatpush1.msra.mxu0 0.0
    %64 = vmatprep.subr.mxu0 0.0
    %65 = vmatpush1.msra.mxu0 0.0
    %66 = vmatprep.subr.mxu0 0.0
    %67 = vmatpush1.msra.mxu0 0.0
    %68 = vmatprep.subr.mxu0 0.0
    %69 = vmatpush1.msra.mxu0 0.0
    %70 = vmatprep.subr.mxu0 0.0
    %71 = vmatpush1.msra.mxu0 0.0
    %72 = vmatprep.subr.mxu0 0.0
    %73 = vmatpush1.msra.mxu0 0.0
    %74 = vmatprep.subr.mxu0 0.0
    %75 = vmatpush1.msra.mxu0 0.0
    %76 = vmatprep.subr.mxu0 0.0
    %77 = vmatpush1.msra.mxu0 0.0
    %78 = vmatprep.subr.mxu0 0.0
    %79 = vmatpush1.msra.mxu0 0.0
    %80 = vmatprep.subr.mxu0 0.0
    %81 = vmatpush1.msra.mxu0 0.0
    %82 = vmatprep.subr.mxu0 0.0
    %83 = vmatpush1.msra.mxu0 0.0
    %84 = vmatprep.subr.mxu0 0.0
    %85 = vmatpush1.msra.mxu0 0.0
    %86 = vmatprep.subr.mxu0 0.0
    %87 = vmatpush1.msra.mxu0 0.0
    %88 = vmatprep.subr.mxu0 0.0
    %89 = vmatpush1.msra.mxu0 0.0
    %90 = vmatprep.subr.mxu0 0.0
    %91 = vmatpush1.msra.mxu0 0.0
    %92 = vmatprep.subr.mxu0 0.0
    %93 = vmatpush1.msra.mxu0 0.0
    %94 = vmatprep.subr.mxu0 0.0
    %95 = vmatpush1.msra.mxu0 0.0
    %96 = vmatprep.subr.mxu0 0.0
    %97 = vmatpush1.msra.mxu0 0.0
    %98 = vmatprep.subr.mxu0 0.0
    %99 = vmatpush1.msra.mxu0 0.0
    %100 = vmatprep.subr.mxu0 0.0
    %101 = vmatpush1.msra.mxu0 0.0
    %102 = vmatprep.subr.mxu0 0.0
    %103 = vmatpush1.msra.mxu0 0.0
    %104 = vmatprep.subr.mxu0 0.0
    %105 = vmatpush1.msra.mxu0 0.0
    %106 = vmatprep.subr.mxu0 0.0
    %107 = vmatpush1.msra.mxu0 0.0
    %108 = vmatprep.subr.mxu0 0.0
    %109 = vmatpush1.msra.mxu0 0.0
    %110 = vmatprep.subr.mxu0 0.0
    %111 = vmatpush1.msra.mxu0 0.0
    %112 = vmatprep.subr.mxu0 0.0
    %113 = vmatpush1.msra.mxu0 0.0
    %114 = vmatprep.subr.mxu0 0.0
    %115 = vmatpush1.msra.mxu0 0.0
    %116 = vmatprep.subr.mxu0 0.0
    %117 = vmatpush1.msra.mxu0 0.0
    %118 = vmatprep.subr.mxu0 0.0
    %119 = vmatpush1.msra.mxu0 0.0
    %120 = vmatprep.subr.mxu0 0.0
    %121 = vmatpush1.msra.mxu0 0.0
    %122 = vmatprep.mubr.f32.mxu0 0.0
    %123 = vmatmul.mubr.f32.gmra.mrb[0].mxu0 %v52
    %v124 = vpop.f32.mrb[0].mxu0
    %v125 = vadd.f32 %v48, %v124
    %v126 = vpop.f32.mrb[0].mxu0
    %127 = vdwg.mxu0
    %v128 = vmax.f32 %v125, 0.0
    %129 = vst [vmem:[#allocation7] sm:$0xff] %v128
    // Predicated region
    $region22: #{tpu_custom_call.1} parent=1 // pred_check
      _
    $region23: #{tpu_custom_call.1} parent=1 // pred_check_branch
      %131 = sbr.rel (0) target = $region25
    $region24: #{tpu_custom_call.1} parent=1 // pred_region
      %s133 = ssub.s32 128, 64
      %134 = vsyncadd [#allocation4], %s133
      %s135 = sshll.u32 [#allocation7], 4
      %s136 = int_to_ptr.vmem [resolvable:$true] %s135
      %141 = dma.vmem_to_hbm [thread:$0]  %s136, 64, %s3, [#allocation4], 64, 64, 4
    $region25: #{tpu_custom_call.1} parent=1 // pred_fallthru
      _
    // Predicated region
    $region26: #{tpu_custom_call.1} parent=1 // pred_check
      _
    $region27: #{tpu_custom_call.1} parent=1 // pred_check_branch
      %143 = sbr.rel (0) target = $region29
    $region28: #{tpu_custom_call.1} parent=1 // pred_region
      %144 = dma.done [#allocation4], 128
    $region29: #{tpu_custom_call.1} parent=1 // pred_fallthru
      _
    %145 = vsyncpa [#allocation3], 1
    %146 = vsyncpa [#allocation6], 1
    %147 = vsyncpa [#allocation4], 1

</llo_original>
